<compile_context>
chip_gen: v6e
topology: v6e:2x2x1
jax: 0.10.0
libtpu: 0.0.40
codegen_flags: <defaults>
</compile_context>

<pallas_src>
import jax
import jax.numpy as jnp
from jax.experimental import pallas as pl
from jax.experimental.pallas import tpu as pltpu


_MIN_ROW_TILE = 16            # sublane-safe row granule (covers f32 and bf16 packing)
_MAX_ROW_TILE = 2048          # ~256 KiB per f32 buffer at 32 features; tiny vs VMEM
_PALLAS_ROW_THRESHOLD = 4096  # below this, XLA's fused dot+bias (roofline, no launch
                              # overhead) is the right choice for a 32->32 linear


def _round_up(n, m):
    return ((n + m - 1) // m) * m


def _cdiv(a, b):
    return -(-a // b)


def _prod(dims):
    p = 1
    for d in dims:
        p *= int(d)
    return p


def _choose_row_tile(rows):
    """Row tile that (a) caps VMEM, (b) gives >=2 grid steps when rows allow so
    v7x's second TensorCore gets work via the "parallel" grid axis, and (c) wastes
    at most ~_MIN_ROW_TILE rows of compute per tile (no 2x rows_pad blowup)."""
    n_tiles = max(_cdiv(rows, _MAX_ROW_TILE),
                  2 if rows >= 2 * _MIN_ROW_TILE else 1)
    return min(_MAX_ROW_TILE, _round_up(_cdiv(rows, n_tiles), _MIN_ROW_TILE))


def _linear_kernel(x_ref, w_ref, b_ref, o_ref):
    # x_ref: (TM, IN) x.dtype   w_ref: (IN, OUT)  (resident across grid steps)
    # b_ref: (1, OUT)           o_ref: (TM, OUT) x.dtype
    x = x_ref[...].astype(jnp.bfloat16)          # VMEM-level cast, no HBM cost
    w = w_ref[...].astype(jnp.bfloat16)
    acc = jnp.dot(x, w, preferred_element_type=jnp.float32)
    o_ref[...] = (acc + b_ref[...].astype(jnp.float32)).astype(o_ref.dtype)


def _linear_pallas(x2d, weight, bias):
    rows, in_f = x2d.shape
    out_f = weight.shape[1]
    tm = _choose_row_tile(rows)
    grid = (pl.cdiv(rows, tm),)                  # partial last block handled by clipping
    b2d = bias.reshape(1, out_f)

    return pl.pallas_call(
        _linear_kernel,
        out_shape=jax.ShapeDtypeStruct((rows, out_f), x2d.dtype),
        grid_spec=pltpu.PrefetchScalarGridSpec(
            num_scalar_prefetch=0,
            grid=grid,
            in_specs=[
                pl.BlockSpec((tm, in_f), lambda i: (i, 0)),        # row tile of x (unpadded)
                pl.BlockSpec((in_f, out_f), lambda i: (0, 0)),     # W resident
                pl.BlockSpec((1, out_f), lambda i: (0, 0)),        # bias resident
            ],
            out_specs=pl.BlockSpec((tm, out_f), lambda i: (i, 0)), # final-width output
        ),
        compiler_params=pltpu.CompilerParams(
            dimension_semantics=("parallel",),
        ),
    )(x2d, weight, b2d)


def to_gpu_wrapper_forward(x, weight, bias, *, force_pallas=False):
    """Equivalent of ToGPUWrapper(nn.Linear(IN, OUT)).forward(x).

    The wrapper's .to(device) moves are identity under JAX; the forward reduces
    to the wrapped Linear: y = x @ W + b (weight stored as (in, out))."""
    *lead, in_f = x.shape
    out_f = weight.shape[1]
    rows = _prod(lead)
    x2d = x.reshape(rows, in_f)

    if rows < _PALLAS_ROW_THRESHOLD and not force_pallas:
        # Small wrapped layer: one fused XLA op, same bf16/f32 numerics as the kernel.
        acc = jnp.dot(x2d.astype(jnp.bfloat16), weight.astype(jnp.bfloat16),
                      preferred_element_type=jnp.float32)
        y2d = (acc + bias.reshape(1, out_f).astype(jnp.float32)).astype(x.dtype)
    else:
        y2d = _linear_pallas(x2d, weight, bias)

    return y2d.reshape(*lead, out_f)


# TODO(synk): CLIPTextModel special-case, __iter__/__next__ and .decode() passthrough of
# ToGPUWrapper are layer-dispatch plumbing with no Pallas equivalent; only the wrapped
# Linear forward is implemented here.

if __name__ == "__main__":
    batch, seq, hidden = 2, 8, 32

    key = jax.random.PRNGKey(0)
    kx, kw, kb, kx2 = jax.random.split(key, 4)

    x = jax.random.normal(kx, (batch, seq, hidden), dtype=jnp.float32)
    # Synthetic params matching nn.Linear shapes (torch weight (out,in) stored
    # transposed as (in,out) here).
    weight = (jax.random.uniform(kw, (hidden, hidden), dtype=jnp.float32) - 0.5) * 0.2
    bias = (jax.random.uniform(kb, (hidden,), dtype=jnp.float32) - 0.5) * 0.2

    y_ref = x @ weight + bias

    # Default dispatch: tiny shapes take the fused-XLA path.
    y_small = to_gpu_wrapper_forward(x, weight, bias)
    jax.block_until_ready(y_small)
    assert y_small.shape == (batch, seq, hidden)
    assert jnp.allclose(y_small, y_ref, atol=5e-2, rtol=5e-2)

    # Force the Pallas path at the same shapes (single full row tile).
    y_pallas = to_gpu_wrapper_forward(x, weight, bias, force_pallas=True)
    jax.block_until_ready(y_pallas)
    assert y_pallas.shape == (batch, seq, hidden)
    assert jnp.allclose(y_pallas, y_ref, atol=5e-2, rtol=5e-2)
    # Both paths use bf16 MXU inputs with f32 accumulate -> no precision jump at
    # the dispatch threshold.
    assert jnp.allclose(y_pallas, y_small, atol=1e-3, rtol=1e-3)

    # Pallas path with rows not a multiple of the row tile: 40 rows -> tm=32,
    # grid=2 with a clipped partial last block (no wrapper-side row pad / slice).
    x_ragged = jax.random.normal(kx2, (5, 8, hidden), dtype=jnp.float32)
    y_ragged_ref = x_ragged @ weight + bias
    y_ragged = to_gpu_wrapper_forward(x_ragged, weight, bias, force_pallas=True)
    jax.block_until_ready(y_ragged)
    assert y_ragged.shape == (5, 8, hidden)
    assert jnp.allclose(y_ragged, y_ragged_ref, atol=5e-2, rtol=5e-2)

    print("KERNEL_OK")
</pallas_src>

<mosaic_0001>
module attributes {stable_mosaic.version = 11 : i64} {
  func.func @_linear_kernel(%arg0: i32, %arg1: memref<16x32xf32, #tpu.memory_space<vmem>>, %arg2: memref<32x32xf32, #tpu.memory_space<vmem>>, %arg3: memref<1x32xf32, #tpu.memory_space<vmem>>, %arg4: memref<16x32xf32, #tpu.memory_space<vmem>>) attributes {dimension_semantics = [#tpu.dimension_semantics<parallel>], iteration_bounds = array<i64: 1>, scalar_prefetch = 0 : i64, scratch_operands = 0 : i64, tpu.core_type = #tpu.core_type<tc>, window_params = [{transform_indices = @transform_0, window_bounds = array<i64: 16, 32>}, {pipeline_mode = #tpu.pipeline_mode<synchronous>, transform_indices = @transform_1, window_bounds = array<i64: 32, 32>}, {pipeline_mode = #tpu.pipeline_mode<synchronous>, transform_indices = @transform_2, window_bounds = array<i64: 1, 32>}, {transform_indices = @transform_3, window_bounds = array<i64: 16, 32>}]} {
    %c0 = arith.constant 0 : index
    %c0_0 = arith.constant 0 : index
    %0 = vector.load %arg1[%c0, %c0_0] : memref<16x32xf32, #tpu.memory_space<vmem>>, vector<16x32xf32>
    %1 = arith.truncf %0 : vector<16x32xf32> to vector<16x32xbf16>
    %c0_1 = arith.constant 0 : index
    %c0_2 = arith.constant 0 : index
    %2 = vector.load %arg2[%c0_1, %c0_2] : memref<32x32xf32, #tpu.memory_space<vmem>>, vector<32x32xf32>
    %3 = arith.truncf %2 : vector<32x32xf32> to vector<32x32xbf16>
    %cst = arith.constant dense<0.000000e+00> : vector<16x32xf32>
    %4 = tpu.matmul %1, %3, %cst {dimension_numbers = #tpu.dot_dimension_numbers<[1], [0], [0], [1], [0, 0, 1, 1], [], []>} : vector<16x32xbf16>, vector<32x32xbf16>, vector<16x32xf32> -> vector<16x32xf32>
    %c0_3 = arith.constant 0 : index
    %c0_4 = arith.constant 0 : index
    %5 = vector.load %arg3[%c0_3, %c0_4] : memref<1x32xf32, #tpu.memory_space<vmem>>, vector<1x32xf32>
    %6 = vector.broadcast %5 : vector<1x32xf32> to vector<16x32xf32>
    %7 = arith.addf %4, %6 : vector<16x32xf32>
    %c0_5 = arith.constant 0 : index
    %c0_6 = arith.constant 0 : index
    %8 = vector.load %arg4[%c0_5, %c0_6] : memref<16x32xf32, #tpu.memory_space<vmem>>, vector<16x32xf32>
    tpu.vector_store %arg4[%c0_5, %c0_6], %7 {strides = array<i32>} : memref<16x32xf32, #tpu.memory_space<vmem>>, vector<16x32xf32>,
    return
  }
  func.func @transform_0(%arg0: i32) -> (i32, i32) {
    %c0_i32 = arith.constant 0 : i32
    %c0_i32_0 = arith.constant 0 : i32
    return %arg0, %c0_i32 : i32, i32
  }
  func.func @transform_1(%arg0: i32) -> (i32, i32) {
    %c0_i32 = arith.constant 0 : i32
    %c0_i32_0 = arith.constant 0 : i32
    %c0_i32_1 = arith.constant 0 : i32
    return %c0_i32, %c0_i32_0 : i32, i32
  }
  func.func @transform_2(%arg0: i32) -> (i32, i32) {
    %c0_i32 = arith.constant 0 : i32
    %c0_i32_0 = arith.constant 0 : i32
    %c0_i32_1 = arith.constant 0 : i32
    return %c0_i32, %c0_i32_0 : i32, i32
  }
  func.func @transform_3(%arg0: i32) -> (i32, i32) {
    %c0_i32 = arith.constant 0 : i32
    %c0_i32_0 = arith.constant 0 : i32
    return %arg0, %c0_i32 : i32, i32
  }
}

</mosaic_0001>

<llo_original>
// kernel: tpu_custom_call.1
$region0: #{tpu_custom_call.1}
  #allocation0 [shape = 'u32[]', space=smem, size = 0x4, offset = 0x4, fixed_abs, tag = 'smem constant byte address 0x4 - core index']
  #allocation1 [shape = 'u32[144,128]{1,0:T(1,128)}', space=vmem, size = 0x12000, scoped, tag = 'internal scratch']
  %s0 = inlined_call_operand.hbm [shape: f32[16,32], index: 0, kind: input, shape index: {}]
  %s1 = inlined_call_operand.hbm [shape: f32[32,32], index: 1, kind: input, shape index: {}]
  %s2 = inlined_call_operand.vmem [shape: f32[1,32], index: 2, kind: input, shape index: {}]
  %s3 = inlined_call_operand.hbm [shape: f32[16,32], index: 3, kind: output, shape index: {}]
  %s4 = sld [smem:[#allocation0]]
  $region30: #{tpu_custom_call.1} parent=0
    _
  %s6 = ssub.s32 1, %s4
  %s7 = scalar_select 0, %s6, %s4
  $region1: #{tpu_custom_call.1} parent=0
    #allocation2 [shape = 'u8[8192]{0}', space=vmem, size = 0x2000, scoped, tag = 'input window, operand 0, single buffered']
    #allocation3 [shape = 's32[1]{0}', space=sflag, size = 0x4, scoped, tag = 'scoped memory for tpu_custom_call.1']
    #allocation4 [shape = 's32[1]{0}', space=sflag, size = 0x4, scoped, tag = 'scoped memory for tpu_custom_call.1']
    #allocation5 [shape = 'u8[16384]{0}', space=vmem, size = 0x4000, scoped, tag = 'input window, operand 1, single buffered']
    #allocation6 [shape = 's32[1]{0}', space=sflag, size = 0x4, scoped, tag = 'scoped memory for tpu_custom_call.1']
    #allocation7 [shape = 'u8[8192]{0}', space=vmem, size = 0x2000, scoped, tag = 'output window, operand 0, single buffered']
    %8 = vsyncpa [#allocation3], 0
    %9 = vsyncpa [#allocation6], 0
    %10 = vsyncpa [#allocation4], 0
    // Predicated region
    $region2: #{tpu_custom_call.1} parent=1 // pred_check
      _
    $region3: #{tpu_custom_call.1} parent=1 // pred_check_branch
      %12 = sbr.rel (0) target = $region5
    $region4: #{tpu_custom_call.1} parent=1 // pred_region
      %s14 = ssub.s32 256, 256
      %15 = vsyncadd [#allocation3], %s14
      %s16 = sshll.u32 [#allocation2], 4
      %s17 = int_to_ptr.vmem [resolvable:$true] %s16
      %22 = dma.hbm_to_vmem [thread:$0]  %s0, 256, %s17, [#allocation3], 128, 128, 8
    $region5: #{tpu_custom_call.1} parent=1 // pred_fallthru
      _
    // Predicated region
    $region6: #{tpu_custom_call.1} parent=1 // pred_check
      _
    $region7: #{tpu_custom_call.1} parent=1 // pred_check_branch
      %24 = sbr.rel (0) target = $region9
    $region8: #{tpu_custom_call.1} parent=1 // pred_region
      %s26 = ssub.s32 512, 512
      %27 = vsyncadd [#allocation6], %s26
      %s28 = sshll.u32 [#allocation5], 4
      %s29 = int_to_ptr.vmem [resolvable:$true] %s28
      %34 = dma.hbm_to_vmem [thread:$0]  %s1, 512, %s29, [#allocation6], 128, 128, 8
    $region9: #{tpu_custom_call.1} parent=1 // pred_fallthru
      _
    // Predicated region
    $region10: #{tpu_custom_call.1} parent=1 // pred_check
      _
    $region11: #{tpu_custom_call.1} parent=1 // pred_check_branch
      %36 = sbr.rel (0) target = $region13
    $region12: #{tpu_custom_call.1} parent=1 // pred_region
      _
    $region13: #{tpu_custom_call.1} parent=1 // pred_fallthru
      _
    // Predicated region
    $region14: #{tpu_custom_call.1} parent=1 // pred_check
      _
    $region15: #{tpu_custom_call.1} parent=1 // pred_check_branch
      %38 = sbr.rel (0) target = $region17
    $region16: #{tpu_custom_call.1} parent=1 // pred_region
      %39 = dma.done [#allocation3], 256
    $region17: #{tpu_custom_call.1} parent=1 // pred_fallthru
      _
    // Predicated region
    $region18: #{tpu_custom_call.1} parent=1 // pred_check
      _
    $region19: #{tpu_custom_call.1} parent=1 // pred_check_branch
      %41 = sbr.rel (0) target = $region21
    $region20: #{tpu_custom_call.1} parent=1 // pred_region
      %42 = dma.done [#allocation6], 512
    $region21: #{tpu_custom_call.1} parent=1 // pred_fallthru
      _
    %v44 = vld [vmem:[#allocation2] sm:$0xff]
    %v45 = vld [vmem:[#allocation2 + $0x8] sm:$0xff]
    %v46 = vpack.c.bf16 %v45, %v44
    %v47 = vld [vmem:[#allocation5] sm:$0xff]
    %v48 = vld [vmem:[#allocation5 + $0x8] sm:$0xff]
    %v49 = vld [vmem:[#allocation5 + $0x10] sm:$0xff]
    %v50 = vld [vmem:[#allocation5 + $0x18] sm:$0xff]
    %v51 = vpack.c.bf16 %v48, %v47
    %v52 = vpack.c.bf16 %v50, %v49
    %v53 = vld [vmem:[%s2] sm:$0x1]
    %v55 = vlaneseq
    %v56 = vshrl.u32 %v55, 7
    %v57 = vsub.s32 0, %v56
    %v58 = vrot.slane %v53, %v57
    %vm60 = vcmask 261120
    %v62 = vsel %vm60, %v46, 0
    %64 = vmatprep.subr.bf16.mxu0 0
    %65 = vmatpush1.bf16.msra.mxu0 0
    %66 = vmatprep.subr.bf16.mxu0 0
    %67 = vmatpush1.bf16.msra.mxu0 0
    %68 = vmatprep.subr.bf16.mxu0 0
    %69 = vmatpush1.bf16.msra.mxu0 0
    %70 = vmatprep.subr.bf16.mxu0 0
    %71 = vmatpush1.bf16.msra.mxu0 0
    %72 = vmatprep.subr.bf16.mxu0 0
    %73 = vmatpush1.bf16.msra.mxu0 0
    %74 = vmatprep.subr.bf16.mxu0 0
    %75 = vmatpush1.bf16.msra.mxu0 0
    %76 = vmatprep.subr.bf16.mxu0 0
    %77 = vmatpush1.bf16.msra.mxu0 %v52
    %78 = vmatprep.subr.bf16.mxu0 0
    %79 = vmatpush1.bf16.msra.mxu0 %v51
    %80 = vmatprep.subr.bf16.mxu0 0
    %81 = vmatpush2.bf16.msra.mxu0 0
    %82 = vmatprep.subr.bf16.mxu0 0
    %83 = vmatpush2.bf16.msra.mxu0 0
    %84 = vmatprep.subr.bf16.mxu0 0
    %85 = vmatpush2.bf16.msra.mxu0 0
    %86 = vmatprep.subr.bf16.mxu0 0
    %87 = vmatpush2.bf16.msra.mxu0 0
    %88 = vmatprep.subr.bf16.mxu0 0
    %89 = vmatpush2.bf16.msra.mxu0 0
    %90 = vmatprep.subr.bf16.mxu0 0
    %91 = vmatpush2.bf16.msra.mxu0 0
    %92 = vmatprep.subr.bf16.mxu0 0
    %93 = vmatpush2.bf16.msra.mxu0 0
    %94 = vmatprep.subr.bf16.mxu0 0
    %95 = vmatpush2.bf16.msra.mxu0 0
    %96 = vmatprep.mubr.bf16.mxu0 0
    %97 = vmatmul.mubr.bf16.gmra.mxu0 %v62
    %v98 = vpop.f32.mrf.mxu0
    %v99 = vadd.f32 %v58, %v98
    %v100 = vpop.f32.mrf.mxu0
    %v101 = vpop.f32.mrf.mxu0
    %v102 = vadd.f32 %v58, %v101
    %v103 = vpop.f32.mrf.mxu0
    %104 = vdwg.mxu0
    %105 = vst.msk [vmem:[#allocation7] sm:$0xff] %vm60, %v99
    %106 = vst.msk [vmem:[#allocation7 + $0x8] sm:$0xff] %vm60, %v102
    // Predicated region
    $region22: #{tpu_custom_call.1} parent=1 // pred_check
      _
    $region23: #{tpu_custom_call.1} parent=1 // pred_check_branch
      %108 = sbr.rel (0) target = $region25
    $region24: #{tpu_custom_call.1} parent=1 // pred_region
      %s110 = ssub.s32 256, 256
      %111 = vsyncadd [#allocation4], %s110
      %s112 = sshll.u32 [#allocation7], 4
      %s113 = int_to_ptr.vmem [resolvable:$true] %s112
      %118 = dma.vmem_to_hbm [thread:$0]  %s113, 256, %s3, [#allocation4], 128, 128, 8
    $region25: #{tpu_custom_call.1} parent=1 // pred_fallthru
      _
    // Predicated region
    $region26: #{tpu_custom_call.1} parent=1 // pred_check
      _
    $region27: #{tpu_custom_call.1} parent=1 // pred_check_branch
      %120 = sbr.rel (0) target = $region29
    $region28: #{tpu_custom_call.1} parent=1 // pred_region
      %121 = dma.done [#allocation4], 256
    $region29: #{tpu_custom_call.1} parent=1 // pred_fallthru
      _
    %122 = vsyncpa [#allocation3], 1
    %123 = vsyncpa [#allocation6], 1
    %124 = vsyncpa [#allocation4], 1

</llo_original>
